<compile_context>
chip_gen: v7x
topology: tpu7x:2x2x1
jax: 0.10.0
libtpu: 0.0.40
codegen_flags: <defaults>
</compile_context>

<pallas_src>
import functools

import jax
import jax.numpy as jnp
from jax.experimental import pallas as pl
from jax.experimental.pallas import tpu as pltpu


def _round_up(x, m):
    return (x + m - 1) // m * m


def _ceil_div(a, b):
    return -(-a // b)


# ---------------------------------------------------------------------------
# Fused Pallas kernels (the whole forward pass is one launch).
# Operands: x tile (tm, Cp) bf16, weights bf16, biases f32 (1, lanes).
# Accumulation and the LeakyReLU / tanh / *0.9 epilogue stay in f32.
# ---------------------------------------------------------------------------
def _deformation_dense_kernel(x_ref, wfc_ref, bfc_ref, wtap_ref, btap_ref, o_ref):
    h = jnp.dot(x_ref[...], wfc_ref[...], preferred_element_type=jnp.float32)
    h = h + bfc_ref[...]
    h = jnp.where(h >= 0.0, h, 0.2 * h)                  # LeakyReLU(0.2), f32
    t = jnp.dot(h.astype(wtap_ref.dtype), wtap_ref[...],
                preferred_element_type=jnp.float32)
    t = t + btap_ref[...]
    o_ref[...] = (jnp.tanh(t) * 0.9).astype(o_ref.dtype)


def _deformation_plain_kernel(x_ref, wtap_ref, btap_ref, o_ref):
    t = jnp.dot(x_ref[...], wtap_ref[...], preferred_element_type=jnp.float32)
    t = t + btap_ref[...]
    o_ref[...] = (jnp.tanh(t) * 0.9).astype(o_ref.dtype)


# ---------------------------------------------------------------------------
# One-time parameter preparation (hoisted out of the per-call forward).
# Conv3d(cin, cout, 1) weight (cout, cin, 1, 1, 1) -> GEMM operand (cin, cout),
# cast to bf16, zero-padded to lane-dense 128-multiples.  Biases stay f32.
# ---------------------------------------------------------------------------
def prepare_params(params, *, make_dense):
    two_p, c = int(params["tapering_w"].shape[0]), int(params["tapering_w"].shape[1])
    c_pad = _round_up(c, 128)
    n_pad = _round_up(two_p, 128)

    w_tap = params["tapering_w"].reshape(two_p, c).T.astype(jnp.bfloat16)
    prepared = {
        "w_tap": jnp.pad(w_tap, ((0, c_pad - c), (0, n_pad - two_p))),
        "b_tap": jnp.pad(params["tapering_b"].astype(jnp.float32),
                         (0, n_pad - two_p)).reshape(1, n_pad),
    }
    if make_dense:
        w_fc = params["fc_w"].reshape(c, c).T.astype(jnp.bfloat16)
        prepared["w_fc"] = jnp.pad(w_fc, ((0, c_pad - c), (0, c_pad - c)))
        prepared["b_fc"] = jnp.pad(params["fc_b"].astype(jnp.float32),
                                   (0, c_pad - c)).reshape(1, c_pad)
    return prepared


# ---------------------------------------------------------------------------
# Forward pass (mirrors Deformation.forward).  `prepared` holds only arrays
# (safe to pass through jit); `make_dense` / `two_p` are static.
# ---------------------------------------------------------------------------
def deformation_forward(prepared, x, *, make_dense, two_p):
    """x: (N, C, D, H, W) float32 -> (N, 2*n_primitives) taperings (f32)."""
    n, c = int(x.shape[0]), int(x.shape[1])
    c_pad, n_pad = int(prepared["w_tap"].shape[0]), int(prepared["w_tap"].shape[1])

    # Only voxel (0,0,0) reaches the returned slice (exact for 1x1x1 convs).
    x0 = x[:, :, 0, 0, 0].astype(jnp.bfloat16)           # (N, C)

    # Row tiling: pad rows to a multiple of 16 (bf16 sublane packing), then
    # choose tm so the grid divides exactly with minimal slack.  For >=256 rows
    # force >=2 grid steps so v7x's two TensorCores both get work.
    TM_CAP = 512
    m16 = _round_up(max(n, 16), 16)
    num_steps = _ceil_div(m16, TM_CAP)
    if num_steps == 1 and m16 >= 256:
        num_steps = 2
    tm = _round_up(_ceil_div(m16, num_steps), 16)
    m_pad = tm * num_steps

    # Zero-pad activation (jnp.pad fuses; no scatter-into-zeros round trip).
    x_p = jnp.pad(x0, ((0, m_pad - n), (0, c_pad - c)))

    operands = [x_p]
    in_specs = [pl.BlockSpec((tm, c_pad), lambda i: (i, 0))]

    if make_dense:
        operands += [prepared["w_fc"], prepared["b_fc"]]
        in_specs += [pl.BlockSpec((c_pad, c_pad), lambda i: (0, 0)),
                     pl.BlockSpec((1, c_pad), lambda i: (0, 0))]
        kernel = _deformation_dense_kernel
    else:
        kernel = _deformation_plain_kernel

    operands += [prepared["w_tap"], prepared["b_tap"]]
    in_specs += [pl.BlockSpec((c_pad, n_pad), lambda i: (0, 0)),
                 pl.BlockSpec((1, n_pad), lambda i: (0, 0))]

    # VMEM budget: double-buffered activation/output tiles plus (conservatively
    # also double-buffered) constant-index weight blocks, with slack.  Capped
    # under v7x's 64 MiB physical VMEM instead of a blind 32 MiB clamp.
    blk = 2 * (tm * c_pad * 2 + tm * n_pad * 2)          # x tile + bf16 out tile
    blk += 2 * (c_pad * n_pad * 2 + n_pad * 4)           # tapering w/b
    if make_dense:
        blk += 2 * (c_pad * c_pad * 2 + c_pad * 4)       # fc w/b
    vmem_limit = int(min(max(blk + (2 << 20), 4 << 20), 56 << 20))

    out = pl.pallas_call(
        kernel,
        out_shape=jax.ShapeDtypeStruct((m_pad, n_pad), jnp.bfloat16),
        grid_spec=pltpu.PrefetchScalarGridSpec(
            num_scalar_prefetch=0,
            grid=(num_steps,),
            in_specs=in_specs,
            out_specs=pl.BlockSpec((tm, n_pad), lambda i: (i, 0)),
        ),
        compiler_params=pltpu.CompilerParams(
            dimension_semantics=("parallel",),
            vmem_limit_bytes=vmem_limit,
        ),
    )(*operands)

    return out[:n, :two_p].astype(jnp.float32)           # == taperings[:, :, 0, 0, 0]


# ---------------------------------------------------------------------------
# Pure-JAX f32 reference: literal full-volume 1x1x1 convs, then the slice.
# ---------------------------------------------------------------------------
def deformation_reference(params, x, *, make_dense):
    n, c, d, h, w = x.shape
    two_p = params["tapering_b"].shape[0]
    xr = jnp.transpose(x, (0, 2, 3, 4, 1)).reshape(-1, c)
    if make_dense:
        xr = xr @ params["fc_w"].reshape(c, c).T + params["fc_b"]
        xr = jnp.where(xr >= 0.0, xr, 0.2 * xr)
    t = xr @ params["tapering_w"].reshape(two_p, c).T + params["tapering_b"]
    t = (jnp.tanh(t) * 0.9).reshape(n, d, h, w, two_p)
    return t[:, 0, 0, 0, :]


# ---------------------------------------------------------------------------
# Parameter construction (deterministic, shapes from the module __init__)
# ---------------------------------------------------------------------------
def init_params(key, n_primitives, input_channels, make_dense):
    c = input_channels
    k_fcw, k_fcb, k_tw, k_tb = jax.random.split(key, 4)
    params = {}
    if make_dense:
        params["fc_w"] = (jax.random.normal(k_fcw, (c, c, 1, 1, 1), jnp.float32)
                          / jnp.sqrt(float(c)))
        params["fc_b"] = jax.random.normal(k_fcb, (c,), jnp.float32) * 0.01
    params["tapering_w"] = (jax.random.normal(
        k_tw, (2 * n_primitives, c, 1, 1, 1), jnp.float32) / jnp.sqrt(float(c)))
    params["tapering_b"] = jax.random.normal(
        k_tb, (2 * n_primitives,), jnp.float32) * 0.01
    return params


if __name__ == "__main__":
    key = jax.random.PRNGKey(0)
    n_primitives, input_channels = 8, 64
    batch, d, h, w = 2, 4, 4, 4

    key, kx, kp_dense, kp_plain = jax.random.split(key, 4)
    x = jax.random.normal(kx, (batch, input_channels, d, h, w), jnp.float32)

    for make_dense, kp in ((True, kp_dense), (False, kp_plain)):
        params = init_params(kp, n_primitives, input_channels, make_dense)
        prepared = jax.tree_util.tree_map(
            jax.block_until_ready, prepare_params(params, make_dense=make_dense))
        fwd = jax.jit(functools.partial(deformation_forward,
                                        make_dense=make_dense,
                                        two_p=2 * n_primitives))
        out = fwd(prepared, x)
        jax.block_until_ready(out)
        assert out.shape == (batch, 2 * n_primitives)
        assert bool(jnp.all(jnp.isfinite(out)))
        ref = deformation_reference(params, x, make_dense=make_dense)
        # bf16 operands + bf16 output vs f32 reference; values bounded by 0.9.
        assert bool(jnp.allclose(out, ref, atol=5e-2, rtol=5e-2)), float(
            jnp.max(jnp.abs(out - ref)))
    print("KERNEL_OK")
</pallas_src>

<mosaic_0001>
module attributes {stable_mosaic.version = 11 : i64} {
  func.func @_deformation_dense_kernel(%arg0: i32, %arg1: memref<16x128xbf16, #tpu.memory_space<vmem>>, %arg2: memref<128x128xbf16, #tpu.memory_space<vmem>>, %arg3: memref<1x128xf32, #tpu.memory_space<vmem>>, %arg4: memref<128x128xbf16, #tpu.memory_space<vmem>>, %arg5: memref<1x128xf32, #tpu.memory_space<vmem>>, %arg6: memref<16x128xbf16, #tpu.memory_space<vmem>>) attributes {dimension_semantics = [#tpu.dimension_semantics<parallel>], iteration_bounds = array<i64: 1>, scalar_prefetch = 0 : i64, scratch_operands = 0 : i64, tpu.core_type = #tpu.core_type<tc>, window_params = [{transform_indices = @transform_0, window_bounds = array<i64: 16, 128>}, {pipeline_mode = #tpu.pipeline_mode<synchronous>, transform_indices = @transform_1, window_bounds = array<i64: 128, 128>}, {pipeline_mode = #tpu.pipeline_mode<synchronous>, transform_indices = @transform_2, window_bounds = array<i64: 1, 128>}, {pipeline_mode = #tpu.pipeline_mode<synchronous>, transform_indices = @transform_3, window_bounds = array<i64: 128, 128>}, {pipeline_mode = #tpu.pipeline_mode<synchronous>, transform_indices = @transform_4, window_bounds = array<i64: 1, 128>}, {transform_indices = @transform_5, window_bounds = array<i64: 16, 128>}]} {
    %c0 = arith.constant 0 : index
    %c0_0 = arith.constant 0 : index
    %0 = vector.load %arg1[%c0, %c0_0] : memref<16x128xbf16, #tpu.memory_space<vmem>>, vector<16x128xbf16>
    %c0_1 = arith.constant 0 : index
    %c0_2 = arith.constant 0 : index
    %1 = vector.load %arg2[%c0_1, %c0_2] : memref<128x128xbf16, #tpu.memory_space<vmem>>, vector<128x128xbf16>
    %cst = arith.constant dense<0.000000e+00> : vector<16x128xf32>
    %2 = tpu.matmul %0, %1, %cst {dimension_numbers = #tpu.dot_dimension_numbers<[1], [0], [0], [1], [0, 0, 1, 1], [], []>} : vector<16x128xbf16>, vector<128x128xbf16>, vector<16x128xf32> -> vector<16x128xf32>
    %c0_3 = arith.constant 0 : index
    %c0_4 = arith.constant 0 : index
    %3 = vector.load %arg3[%c0_3, %c0_4] : memref<1x128xf32, #tpu.memory_space<vmem>>, vector<1x128xf32>
    %4 = vector.broadcast %3 : vector<1x128xf32> to vector<16x128xf32>
    %5 = arith.addf %2, %4 : vector<16x128xf32>
    %cst_5 = arith.constant 0.000000e+00 : f32
    %6 = vector.broadcast %cst_5 : f32 to vector<16x128xf32>
    %7 = arith.cmpf oge, %5, %6 : vector<16x128xf32>
    %cst_6 = arith.constant 2.000000e-01 : f32
    %8 = vector.broadcast %cst_6 : f32 to vector<16x128xf32>
    %9 = arith.mulf %8, %5 : vector<16x128xf32>
    %10 = arith.select %7, %5, %9 : vector<16x128xi1>, vector<16x128xf32>
    %11 = arith.truncf %10 : vector<16x128xf32> to vector<16x128xbf16>
    %c0_7 = arith.constant 0 : index
    %c0_8 = arith.constant 0 : index
    %12 = vector.load %arg4[%c0_7, %c0_8] : memref<128x128xbf16, #tpu.memory_space<vmem>>, vector<128x128xbf16>
    %cst_9 = arith.constant dense<0.000000e+00> : vector<16x128xf32>
    %13 = tpu.matmul %11, %12, %cst_9 {dimension_numbers = #tpu.dot_dimension_numbers<[1], [0], [0], [1], [0, 0, 1, 1], [], []>} : vector<16x128xbf16>, vector<128x128xbf16>, vector<16x128xf32> -> vector<16x128xf32>
    %c0_10 = arith.constant 0 : index
    %c0_11 = arith.constant 0 : index
    %14 = vector.load %arg5[%c0_10, %c0_11] : memref<1x128xf32, #tpu.memory_space<vmem>>, vector<1x128xf32>
    %15 = vector.broadcast %14 : vector<1x128xf32> to vector<16x128xf32>
    %16 = arith.addf %13, %15 : vector<16x128xf32>
    %17 = math.tanh %16 : vector<16x128xf32>
    %cst_12 = arith.constant 0.899999976 : f32
    %18 = vector.broadcast %cst_12 : f32 to vector<16x128xf32>
    %19 = arith.mulf %17, %18 : vector<16x128xf32>
    %20 = arith.truncf %19 : vector<16x128xf32> to vector<16x128xbf16>
    %c0_13 = arith.constant 0 : index
    %c0_14 = arith.constant 0 : index
    %21 = vector.load %arg6[%c0_13, %c0_14] : memref<16x128xbf16, #tpu.memory_space<vmem>>, vector<16x128xbf16>
    tpu.vector_store %arg6[%c0_13, %c0_14], %20 {strides = array<i32>} : memref<16x128xbf16, #tpu.memory_space<vmem>>, vector<16x128xbf16>,
    return
  }
  func.func @transform_0(%arg0: i32) -> (i32, i32) {
    %c0_i32 = arith.constant 0 : i32
    %c0_i32_0 = arith.constant 0 : i32
    return %arg0, %c0_i32 : i32, i32
  }
  func.func @transform_1(%arg0: i32) -> (i32, i32) {
    %c0_i32 = arith.constant 0 : i32
    %c0_i32_0 = arith.constant 0 : i32
    %c0_i32_1 = arith.constant 0 : i32
    return %c0_i32, %c0_i32_0 : i32, i32
  }
  func.func @transform_2(%arg0: i32) -> (i32, i32) {
    %c0_i32 = arith.constant 0 : i32
    %c0_i32_0 = arith.constant 0 : i32
    %c0_i32_1 = arith.constant 0 : i32
    return %c0_i32, %c0_i32_0 : i32, i32
  }
  func.func @transform_3(%arg0: i32) -> (i32, i32) {
    %c0_i32 = arith.constant 0 : i32
    %c0_i32_0 = arith.constant 0 : i32
    %c0_i32_1 = arith.constant 0 : i32
    return %c0_i32, %c0_i32_0 : i32, i32
  }
  func.func @transform_4(%arg0: i32) -> (i32, i32) {
    %c0_i32 = arith.constant 0 : i32
    %c0_i32_0 = arith.constant 0 : i32
    %c0_i32_1 = arith.constant 0 : i32
    return %c0_i32, %c0_i32_0 : i32, i32
  }
  func.func @transform_5(%arg0: i32) -> (i32, i32) {
    %c0_i32 = arith.constant 0 : i32
    %c0_i32_0 = arith.constant 0 : i32
    return %arg0, %c0_i32 : i32, i32
  }
}

</mosaic_0001>

<llo_original>
// kernel: deformation_forward.1
$region0: #{deformation_forward.1}
  #allocation0 [shape = 'u32[]', space=smem, size = 0x4, offset = 0x4, fixed_abs, tag = 'smem constant byte address 0x4 - core index']
  #allocation1 [shape = 'u32[144,128]{1,0:T(1,128)}', space=vmem, size = 0x12000, scoped, tag = 'internal scratch']
  %s0 = inlined_call_operand.vmem [shape: bf16[16,128], index: 0, kind: input, shape index: {}]
  %s1 = inlined_call_operand.hbm [shape: bf16[128,128], index: 1, kind: input, shape index: {}]
  %s2 = inlined_call_operand.vmem [shape: f32[1,128], index: 2, kind: input, shape index: {}]
  %s3 = inlined_call_operand.hbm [shape: bf16[128,128], index: 3, kind: input, shape index: {}]
  %s4 = inlined_call_operand.vmem [shape: f32[1,128], index: 4, kind: input, shape index: {}]
  %s5 = inlined_call_operand.vmem [shape: bf16[16,128], index: 5, kind: output, shape index: {}]
  %s6 = sld [smem:[#allocation0]]
  $region38: #{deformation_forward.1} parent=0
    _
  %s8 = ssub.s32 1, %s6
  %s9 = scalar_select 0, %s8, %s6
  $region1: #{deformation_forward.1} parent=0
    #allocation2 [shape = 'u8[32768]{0}', space=vmem, size = 0x8000, scoped, tag = 'input window, operand 1, single buffered']
    #allocation3 [shape = 's32[1]{0}', space=sflag, size = 0x4, scoped, tag = 'scoped memory for deformation_forward.1']
    #allocation4 [shape = 'u8[32768]{0}', space=vmem, size = 0x8000, scoped, tag = 'input window, operand 3, single buffered']
    #allocation5 [shape = 's32[1]{0}', space=sflag, size = 0x4, scoped, tag = 'scoped memory for deformation_forward.1']
    %10 = vsyncpa [#allocation3], 0
    %11 = vsyncpa [#allocation5], 0
    // Predicated region
    $region2: #{deformation_forward.1} parent=1 // pred_check
      _
    $region3: #{deformation_forward.1} parent=1 // pred_check_branch
      %13 = sbr.rel (0) target = $region5
    $region4: #{deformation_forward.1} parent=1 // pred_region
      _
    $region5: #{deformation_forward.1} parent=1 // pred_fallthru
      _
    // Predicated region
    $region6: #{deformation_forward.1} parent=1 // pred_check
      _
    $region7: #{deformation_forward.1} parent=1 // pred_check_branch
      %15 = sbr.rel (0) target = $region9
    $region8: #{deformation_forward.1} parent=1 // pred_region
      %s17 = ssub.s32 1024, 1024
      %18 = vsyncadd [#allocation3], %s17
      %s19 = sshll.u32 [#allocation2], 4
      %s20 = int_to_ptr.vmem [resolvable:$true] %s19
      %25 = dma.hbm_to_vmem [thread:$0]  %s1, 1024, %s20, [#allocation3], 64, 64, 4
    $region9: #{deformation_forward.1} parent=1 // pred_fallthru
      _
    // Predicated region
    $region10: #{deformation_forward.1} parent=1 // pred_check
      _
    $region11: #{deformation_forward.1} parent=1 // pred_check_branch
      %27 = sbr.rel (0) target = $region13
    $region12: #{deformation_forward.1} parent=1 // pred_region
      _
    $region13: #{deformation_forward.1} parent=1 // pred_fallthru
      _
    // Predicated region
    $region14: #{deformation_forward.1} parent=1 // pred_check
      _
    $region15: #{deformation_forward.1} parent=1 // pred_check_branch
      %29 = sbr.rel (0) target = $region17
    $region16: #{deformation_forward.1} parent=1 // pred_region
      %s31 = ssub.s32 1024, 1024
      %32 = vsyncadd [#allocation5], %s31
      %s33 = sshll.u32 [#allocation4], 4
      %s34 = int_to_ptr.vmem [resolvable:$true] %s33
      %39 = dma.hbm_to_vmem [thread:$0]  %s3, 1024, %s34, [#allocation5], 64, 64, 4
    $region17: #{deformation_forward.1} parent=1 // pred_fallthru
      _
    // Predicated region
    $region18: #{deformation_forward.1} parent=1 // pred_check
      _
    $region19: #{deformation_forward.1} parent=1 // pred_check_branch
      %41 = sbr.rel (0) target = $region21
    $region20: #{deformation_forward.1} parent=1 // pred_region
      _
    $region21: #{deformation_forward.1} parent=1 // pred_fallthru
      _
    // Predicated region
    $region22: #{deformation_forward.1} parent=1 // pred_check
      _
    $region23: #{deformation_forward.1} parent=1 // pred_check_branch
      %43 = sbr.rel (0) target = $region25
    $region24: #{deformation_forward.1} parent=1 // pred_region
      %44 = dma.done [#allocation3], 1024
    $region25: #{deformation_forward.1} parent=1 // pred_fallthru
      _
    // Predicated region
    $region26: #{deformation_forward.1} parent=1 // pred_check
      _
    $region27: #{deformation_forward.1} parent=1 // pred_check_branch
      %46 = sbr.rel (0) target = $region29
    $region28: #{deformation_forward.1} parent=1 // pred_region
      %47 = dma.done [#allocation5], 1024
    $region29: #{deformation_forward.1} parent=1 // pred_fallthru
      _
    %v49 = vld [vmem:[%s0] sm:$0xf]
    %v50 = vld [vmem:[%s0 + $0x4] sm:$0xf]
    %v51 = vld [vmem:[#allocation2] sm:$0xf]
    %v52 = vld [vmem:[#allocation2 + $0x4] sm:$0xf]
    %v53 = vld [vmem:[#allocation2 + $0x8] sm:$0xf]
    %v54 = vld [vmem:[#allocation2 + $0xc] sm:$0xf]
    %v55 = vld [vmem:[#allocation2 + $0x10] sm:$0xf]
    %v56 = vld [vmem:[#allocation2 + $0x14] sm:$0xf]
    %v57 = vld [vmem:[#allocation2 + $0x18] sm:$0xf]
    %v58 = vld [vmem:[#allocation2 + $0x1c] sm:$0xf]
    %v59 = vld [vmem:[#allocation2 + $0x20] sm:$0xf]
    %v60 = vld [vmem:[#allocation2 + $0x24] sm:$0xf]
    %v61 = vld [vmem:[#allocation2 + $0x28] sm:$0xf]
    %v62 = vld [vmem:[#allocation2 + $0x2c] sm:$0xf]
    %v63 = vld [vmem:[#allocation2 + $0x30] sm:$0xf]
    %v64 = vld [vmem:[#allocation2 + $0x34] sm:$0xf]
    %v65 = vld [vmem:[#allocation2 + $0x38] sm:$0xf]
    %v66 = vld [vmem:[#allocation2 + $0x3c] sm:$0xf]
    %v67 = vld [vmem:[%s2] sm:$0x1]
    %v69 = vlaneseq
    %v70 = vshrl.u32 %v69, 7
    %v71 = vsub.s32 0, %v70
    %v72 = vrot.slane %v67, %v71
    %v76 = vunpack.c.l.b16 %v49
    %v77 = vunpack.c.l.b16 %v50
    %v78 = vpack.c.b16 %v77, %v76
    %v96 = vunpack.c.l.b16 %v51
    %v97 = vunpack.c.l.b16 %v52
    %v98 = vunpack.c.l.b16 %v53
    %v99 = vunpack.c.l.b16 %v54
    %v100 = vunpack.c.l.b16 %v55
    %v101 = vunpack.c.l.b16 %v56
    %v102 = vunpack.c.l.b16 %v57
    %v103 = vunpack.c.l.b16 %v58
    %v104 = vunpack.c.l.b16 %v59
    %v105 = vunpack.c.l.b16 %v60
    %v106 = vunpack.c.l.b16 %v61
    %v107 = vunpack.c.l.b16 %v62
    %v108 = vunpack.c.l.b16 %v63
    %v109 = vunpack.c.l.b16 %v64
    %v110 = vunpack.c.l.b16 %v65
    %v111 = vunpack.c.l.b16 %v66
    %v112 = vpack.c.b16 %v97, %v96
    %v113 = vpack.c.b16 %v99, %v98
    %v114 = vpack.c.b16 %v101, %v100
    %v115 = vpack.c.b16 %v103, %v102
    %v116 = vpack.c.b16 %v105, %v104
    %v117 = vpack.c.b16 %v107, %v106
    %v118 = vpack.c.b16 %v109, %v108
    %v119 = vpack.c.b16 %v111, %v110
    %128 = vmatprep.subr.bf16.mxu0 0
    %129 = vmatpush1.bf16.msra.mxu0 %v112
    %130 = vmatprep.subr.bf16.mxu0 0
    %131 = vmatpush1.bf16.msra.mxu0 %v113
    %132 = vmatprep.subr.bf16.mxu0 0
    %133 = vmatpush1.bf16.msra.mxu0 %v114
    %134 = vmatprep.subr.bf16.mxu0 0
    %135 = vmatpush1.bf16.msra.mxu0 %v115
    %136 = vmatprep.subr.bf16.mxu0 0
    %137 = vmatpush1.bf16.msra.mxu0 %v116
    %138 = vmatprep.subr.bf16.mxu0 0
    %139 = vmatpush1.bf16.msra.mxu0 %v117
    %140 = vmatprep.subr.bf16.mxu0 0
    %141 = vmatpush1.bf16.msra.mxu0 %v118
    %142 = vmatprep.subr.bf16.mxu0 0
    %143 = vmatpush1.bf16.msra.mxu0 %v119
    %144 = vmatprep.subr.bf16.mxu0 0
    %145 = vmatpush1.bf16.msra.mxu0 0
    %146 = vmatprep.subr.bf16.mxu0 0
    %147 = vmatpush1.bf16.msra.mxu0 0
    %148 = vmatprep.subr.bf16.mxu0 0
    %149 = vmatpush1.bf16.msra.mxu0 0
    %150 = vmatprep.subr.bf16.mxu0 0
    %151 = vmatpush1.bf16.msra.mxu0 0
    %152 = vmatprep.subr.bf16.mxu0 0
    %153 = vmatpush1.bf16.msra.mxu0 0
    %154 = vmatprep.subr.bf16.mxu0 0
    %155 = vmatpush1.bf16.msra.mxu0 0
    %156 = vmatprep.subr.bf16.mxu0 0
    %157 = vmatpush1.bf16.msra.mxu0 0
    %158 = vmatprep.subr.bf16.mxu0 0
    %159 = vmatpush1.bf16.msra.mxu0 0
    %160 = vmatprep.mubr.bf16.mxu0 0
    %161 = vmatmul.mubr.bf16.gmra.mrb[0].mxu0 %v78
    %v162 = vpop.f32.mrb[0].mxu0
    %v163 = vadd.f32 %v72, %v162
    %v164 = vpop.f32.mrb[0].mxu0
    %v165 = vpop.f32.mrb[0].mxu0
    %v166 = vadd.f32 %v72, %v165
    %v167 = vpop.f32.mrb[0].mxu0
    %168 = vdwg.mxu0
    %vm169 = vcmp.ge.f32.partialorder %v163, 0.0
    %vm170 = vcmp.ge.f32.partialorder %v166, 0.0
    %v171 = vmul.f32 %v163, 0.2
    %v172 = vmul.f32 %v166, 0.2
    %v173 = vsel %vm169, %v163, %v171
    %v174 = vsel %vm170, %v166, %v172
    %v175 = vpack.c.bf16 %v174, %v173
    %v176 = vld [vmem:[#allocation4] sm:$0xf]
    %v177 = vld [vmem:[#allocation4 + $0x4] sm:$0xf]
    %v178 = vld [vmem:[#allocation4 + $0x8] sm:$0xf]
    %v179 = vld [vmem:[#allocation4 + $0xc] sm:$0xf]
    %v180 = vld [vmem:[#allocation4 + $0x10] sm:$0xf]
    %v181 = vld [vmem:[#allocation4 + $0x14] sm:$0xf]
    %v182 = vld [vmem:[#allocation4 + $0x18] sm:$0xf]
    %v183 = vld [vmem:[#allocation4 + $0x1c] sm:$0xf]
    %v184 = vld [vmem:[#allocation4 + $0x20] sm:$0xf]
    %v185 = vld [vmem:[#allocation4 + $0x24] sm:$0xf]
    %v186 = vld [vmem:[#allocation4 + $0x28] sm:$0xf]
    %v187 = vld [vmem:[#allocation4 + $0x2c] sm:$0xf]
    %v188 = vld [vmem:[#allocation4 + $0x30] sm:$0xf]
    %v189 = vld [vmem:[#allocation4 + $0x34] sm:$0xf]
    %v190 = vld [vmem:[#allocation4 + $0x38] sm:$0xf]
    %v191 = vld [vmem:[#allocation4 + $0x3c] sm:$0xf]
    %v192 = vld [vmem:[%s4] sm:$0x1]
    %v194 = vlaneseq
    %v195 = vshrl.u32 %v194, 7
    %v196 = vsub.s32 0, %v195
    %v197 = vrot.slane %v192, %v196
    %v215 = vunpack.c.l.b16 %v176
    %v216 = vunpack.c.l.b16 %v177
    %v217 = vunpack.c.l.b16 %v178
    %v218 = vunpack.c.l.b16 %v179
    %v219 = vunpack.c.l.b16 %v180
    %v220 = vunpack.c.l.b16 %v181
    %v221 = vunpack.c.l.b16 %v182
    %v222 = vunpack.c.l.b16 %v183
    %v223 = vunpack.c.l.b16 %v184
    %v224 = vunpack.c.l.b16 %v185
    %v225 = vunpack.c.l.b16 %v186
    %v226 = vunpack.c.l.b16 %v187
    %v227 = vunpack.c.l.b16 %v188
    %v228 = vunpack.c.l.b16 %v189
    %v229 = vunpack.c.l.b16 %v190
    %v230 = vunpack.c.l.b16 %v191
    %v231 = vpack.c.b16 %v216, %v215
    %v232 = vpack.c.b16 %v218, %v217
    %v233 = vpack.c.b16 %v220, %v219
    %v234 = vpack.c.b16 %v222, %v221
    %v235 = vpack.c.b16 %v224, %v223
    %v236 = vpack.c.b16 %v226, %v225
    %v237 = vpack.c.b16 %v228, %v227
    %v238 = vpack.c.b16 %v230, %v229
    %247 = vmatprep.subr.bf16.mxu0 0
    %248 = vmatpush1.bf16.msra.mxu0 %v231
    %249 = vmatprep.subr.bf16.mxu0 0
    %250 = vmatpush1.bf16.msra.mxu0 %v232
    %251 = vmatprep.subr.bf16.mxu0 0
    %252 = vmatpush1.bf16.msra.mxu0 %v233
    %253 = vmatprep.subr.bf16.mxu0 0
    %254 = vmatpush1.bf16.msra.mxu0 %v234
    %255 = vmatprep.subr.bf16.mxu0 0
    %256 = vmatpush1.bf16.msra.mxu0 %v235
    %257 = vmatprep.subr.bf16.mxu0 0
    %258 = vmatpush1.bf16.msra.mxu0 %v236
    %259 = vmatprep.subr.bf16.mxu0 0
    %260 = vmatpush1.bf16.msra.mxu0 %v237
    %261 = vmatprep.subr.bf16.mxu0 0
    %262 = vmatpush1.bf16.msra.mxu0 %v238
    %263 = vmatprep.subr.bf16.mxu0 0
    %264 = vmatpush1.bf16.msra.mxu0 0
    %265 = vmatprep.subr.bf16.mxu0 0
    %266 = vmatpush1.bf16.msra.mxu0 0
    %267 = vmatprep.subr.bf16.mxu0 0
    %268 = vmatpush1.bf16.msra.mxu0 0
    %269 = vmatprep.subr.bf16.mxu0 0
    %270 = vmatpush1.bf16.msra.mxu0 0
    %271 = vmatprep.subr.bf16.mxu0 0
    %272 = vmatpush1.bf16.msra.mxu0 0
    %273 = vmatprep.subr.bf16.mxu0 0
    %274 = vmatpush1.bf16.msra.mxu0 0
    %275 = vmatprep.subr.bf16.mxu0 0
    %276 = vmatpush1.bf16.msra.mxu0 0
    %277 = vmatprep.subr.bf16.mxu0 0
    %278 = vmatpush1.bf16.msra.mxu0 0
    %279 = vmatprep.mubr.bf16.mxu0 0
    %280 = vmatmul.mubr.bf16.gmra.mrb[0].mxu0 %v175
    %v281 = vpop.f32.mrb[0].mxu0
    %v282 = vadd.f32 %v197, %v281
    %v283 = vpop.f32.mrb[0].mxu0
    %v284 = vpop.f32.mrb[0].mxu0
    %v285 = vadd.f32 %v197, %v284
    %v286 = vpop.f32.mrb[0].mxu0
    %287 = vdwg.mxu0
    %v288 = vtanh.pop %v282
    %v289 = vtanh.pop %v285
    %v290 = vmul.f32 %v288, 0.9
    %v291 = vmul.f32 %v289, 0.9
    %v292 = vpack.c.bf16 %v291, %v290
    %v294 = vunpack.c.l.b16 %v292
    %v295 = vunpack.c.h.b16 %v292
    %v296 = vpack.c.b16 %v294, %v294
    %v297 = vpack.c.b16 %v295, %v295
    %300 = vst [vmem:[%s5] sm:$0xf] %v296
    %301 = vst [vmem:[%s5 + $0x4] sm:$0xf] %v297
    // Predicated region
    $region30: #{deformation_forward.1} parent=1 // pred_check
      _
    $region31: #{deformation_forward.1} parent=1 // pred_check_branch
      %303 = sbr.rel (0) target = $region33
    $region32: #{deformation_forward.1} parent=1 // pred_region
      _
    $region33: #{deformation_forward.1} parent=1 // pred_fallthru
      _
    // Predicated region
    $region34: #{deformation_forward.1} parent=1 // pred_check
      _
    $region35: #{deformation_forward.1} parent=1 // pred_check_branch
      %305 = sbr.rel (0) target = $region37
    $region36: #{deformation_forward.1} parent=1 // pred_region
      _
    $region37: #{deformation_forward.1} parent=1 // pred_fallthru
      _
    %306 = vsyncpa [#allocation3], 1
    %307 = vsyncpa [#allocation5], 1

</llo_original>
